<compile_context>
chip_gen: v7x
topology: tpu7x:2x2x1
jax: 0.10.0
libtpu: 0.0.40
codegen_flags: <defaults>
</compile_context>

<pallas_src>
import functools

import jax
import jax.numpy as jnp
from jax.experimental import pallas as pl
from jax.experimental.pallas import tpu as pltpu


def _round_up(x, m):
    return ((x + m - 1) // m) * m


def _fused_mlp_kernel(*refs, n_layers):
    """Fused (Linear -> ReLU) * (n_layers-1) -> Linear.

    refs = (x_ref, w0, b0, ..., w{L-1}, b{L-1}, o_ref, h0, ..., h{L-2})
    All tiles are VMEM-resident; matmuls hit the MXU (f32 accumulation),
    bias add + ReLU hit the VPU.  Intermediate activations never leave VMEM.
    """
    x_ref = refs[0]
    wb = refs[1:1 + 2 * n_layers]
    o_ref = refs[1 + 2 * n_layers]
    scratch = refs[2 + 2 * n_layers:]

    h = x_ref[...]
    for i in range(n_layers):
        w = wb[2 * i][...]
        b = wb[2 * i + 1][...]          # (1, dout_pad) -> broadcast once per layer
        y = jnp.dot(h, w, preferred_element_type=jnp.float32) + b
        if i < n_layers - 1:
            scratch[i][...] = jnp.maximum(y, 0.0)   # VMEM-resident activation
            h = scratch[i][...]
        else:
            o_ref[...] = y.astype(o_ref.dtype)


def _mlp_forward(x, params):
    """x: (B, in_dim); params: tuple of (w: (in, out), b: (1, out))."""
    n_layers = len(params)
    B, in_dim = x.shape
    out_dim = params[-1][0].shape[1]

    # Batch tile: 128 rows for big batches, an 8-row multiple for small ones.
    tm = 128 if B >= 128 else _round_up(B, 8)
    B_pad = _round_up(B, tm)
    in_pad = _round_up(in_dim, 128)
    out_pad = _round_up(out_dim, 128)

    # Zero-pad everything to lane-dense (128-multiple) feature widths.
    x_p = jnp.pad(x, ((0, B_pad - B), (0, in_pad - in_dim)))

    padded_wb = []
    in_specs = [pl.BlockSpec((tm, in_pad), lambda i: (i, 0))]
    hidden_pads = []
    prev_pad = in_pad
    for li, (w, b) in enumerate(params):
        din, dout = w.shape
        dpad = _round_up(dout, 128)
        w_p = jnp.pad(w, ((0, prev_pad - din), (0, dpad - dout)))
        b_p = jnp.pad(b, ((0, 0), (0, dpad - dout)))
        padded_wb += [w_p, b_p]
        in_specs += [
            pl.BlockSpec((prev_pad, dpad), lambda i: (0, 0)),  # weight (resident)
            pl.BlockSpec((1, dpad), lambda i: (0, 0)),         # bias   (resident)
        ]
        if li < n_layers - 1:
            hidden_pads.append(dpad)
        prev_pad = dpad

    # TODO(synk): if feature dims ever exceed what fits in VMEM, add an (M,N,K)
    # grid with a K-reduction axis, f32 accumulator scratch and pl.when
    # init/finalize; unnecessary at these sizes (total weights ~< 200 KiB).
    kernel = functools.partial(_fused_mlp_kernel, n_layers=n_layers)
    out_p = pl.pallas_call(
        kernel,
        out_shape=jax.ShapeDtypeStruct((B_pad, out_pad), x.dtype),
        grid=(B_pad // tm,),
        in_specs=in_specs,
        out_specs=pl.BlockSpec((tm, out_pad), lambda i: (i, 0)),
        scratch_shapes=[pltpu.VMEM((tm, hp), jnp.float32) for hp in hidden_pads],
        compiler_params=pltpu.CompilerParams(
            dimension_semantics=("parallel",),  # batch rows shard across TCs (v7x)
        ),
    )(x_p, *padded_wb)
    return out_p[:B, :out_dim]


mlp_forward = jax.jit(_mlp_forward)


def init_mlp_params(key, input_size, hidden_layers, output_size):
    """Deterministic init matching nn.Linear shapes (weights stored transposed)."""
    dims = [input_size] + list(hidden_layers) + [output_size]
    params = []
    for i in range(len(dims) - 1):
        in_dim, out_dim = dims[i], dims[i + 1]
        key, wk, bk = jax.random.split(key, 3)
        bound = 1.0 / (in_dim ** 0.5)  # same range as PyTorch's default init
        w = jax.random.uniform(wk, (in_dim, out_dim), jnp.float32, -bound, bound)
        b = jax.random.uniform(bk, (1, out_dim), jnp.float32, -bound, bound)
        params.append((w, b))
    return tuple(params)


if __name__ == "__main__":
    # Shapes consistent with MLP(input_size=32, hidden_layers=[64, 64],
    # output_size=16), batch=8.
    input_size, hidden_layers, output_size = 32, [64, 64], 16
    batch = 8

    key = jax.random.PRNGKey(0)
    key, xk = jax.random.split(key)
    x = jax.random.normal(xk, (batch, input_size), dtype=jnp.float32)

    params = init_mlp_params(key, input_size, hidden_layers, output_size)

    out = mlp_forward(x, params)
    jax.block_until_ready(out)

    # Pure-JAX reference of the same forward pass.
    ref = x
    for i, (w, b) in enumerate(params):
        ref = ref @ w + b
        if i != len(params) - 1:
            ref = jnp.maximum(ref, 0.0)

    assert out.shape == (batch, output_size), out.shape
    assert jnp.allclose(out, ref, atol=1e-5, rtol=1e-5)

    print("KERNEL_OK")
</pallas_src>

<mosaic_0001>
module attributes {stable_mosaic.version = 11 : i64} {
  func.func @_fused_mlp_kernel(%arg0: i32, %arg1: memref<8x128xf32, #tpu.memory_space<vmem>>, %arg2: memref<128x128xf32, #tpu.memory_space<vmem>>, %arg3: memref<1x128xf32, #tpu.memory_space<vmem>>, %arg4: memref<128x128xf32, #tpu.memory_space<vmem>>, %arg5: memref<1x128xf32, #tpu.memory_space<vmem>>, %arg6: memref<128x128xf32, #tpu.memory_space<vmem>>, %arg7: memref<1x128xf32, #tpu.memory_space<vmem>>, %arg8: memref<8x128xf32, #tpu.memory_space<vmem>>, %arg9: memref<8x128xf32, #tpu.memory_space<vmem>>, %arg10: memref<8x128xf32, #tpu.memory_space<vmem>>) attributes {dimension_semantics = [#tpu.dimension_semantics<parallel>], iteration_bounds = array<i64: 1>, scalar_prefetch = 0 : i64, scratch_operands = 2 : i64, tpu.core_type = #tpu.core_type<tc>, window_params = [{transform_indices = @transform_0, window_bounds = array<i64: 8, 128>}, {pipeline_mode = #tpu.pipeline_mode<synchronous>, transform_indices = @transform_1, window_bounds = array<i64: 128, 128>}, {pipeline_mode = #tpu.pipeline_mode<synchronous>, transform_indices = @transform_2, window_bounds = array<i64: 1, 128>}, {pipeline_mode = #tpu.pipeline_mode<synchronous>, transform_indices = @transform_3, window_bounds = array<i64: 128, 128>}, {pipeline_mode = #tpu.pipeline_mode<synchronous>, transform_indices = @transform_4, window_bounds = array<i64: 1, 128>}, {pipeline_mode = #tpu.pipeline_mode<synchronous>, transform_indices = @transform_5, window_bounds = array<i64: 128, 128>}, {pipeline_mode = #tpu.pipeline_mode<synchronous>, transform_indices = @transform_6, window_bounds = array<i64: 1, 128>}, {transform_indices = @transform_7, window_bounds = array<i64: 8, 128>}]} {
    %c0 = arith.constant 0 : index
    %c0_0 = arith.constant 0 : index
    %0 = vector.load %arg1[%c0, %c0_0] : memref<8x128xf32, #tpu.memory_space<vmem>>, vector<8x128xf32>
    %c0_1 = arith.constant 0 : index
    %c0_2 = arith.constant 0 : index
    %1 = vector.load %arg2[%c0_1, %c0_2] : memref<128x128xf32, #tpu.memory_space<vmem>>, vector<128x128xf32>
    %c0_3 = arith.constant 0 : index
    %c0_4 = arith.constant 0 : index
    %2 = vector.load %arg3[%c0_3, %c0_4] : memref<1x128xf32, #tpu.memory_space<vmem>>, vector<1x128xf32>
    %cst = arith.constant dense<0.000000e+00> : vector<8x128xf32>
    %3 = tpu.matmul %0, %1, %cst {dimension_numbers = #tpu.dot_dimension_numbers<[1], [0], [0], [1], [0, 0, 1, 1], [], []>} : vector<8x128xf32>, vector<128x128xf32>, vector<8x128xf32> -> vector<8x128xf32>
    %4 = vector.broadcast %2 : vector<1x128xf32> to vector<8x128xf32>
    %5 = arith.addf %3, %4 : vector<8x128xf32>
    %cst_5 = arith.constant 0.000000e+00 : f32
    %6 = vector.broadcast %cst_5 : f32 to vector<8x128xf32>
    %7 = arith.maximumf %5, %6 : vector<8x128xf32>
    %c0_6 = arith.constant 0 : index
    %c0_7 = arith.constant 0 : index
    %8 = vector.load %arg9[%c0_6, %c0_7] : memref<8x128xf32, #tpu.memory_space<vmem>>, vector<8x128xf32>
    tpu.vector_store %arg9[%c0_6, %c0_7], %7 {strides = array<i32>} : memref<8x128xf32, #tpu.memory_space<vmem>>, vector<8x128xf32>,
    %c0_8 = arith.constant 0 : index
    %c0_9 = arith.constant 0 : index
    %9 = vector.load %arg9[%c0_8, %c0_9] : memref<8x128xf32, #tpu.memory_space<vmem>>, vector<8x128xf32>
    %c0_10 = arith.constant 0 : index
    %c0_11 = arith.constant 0 : index
    %10 = vector.load %arg4[%c0_10, %c0_11] : memref<128x128xf32, #tpu.memory_space<vmem>>, vector<128x128xf32>
    %c0_12 = arith.constant 0 : index
    %c0_13 = arith.constant 0 : index
    %11 = vector.load %arg5[%c0_12, %c0_13] : memref<1x128xf32, #tpu.memory_space<vmem>>, vector<1x128xf32>
    %cst_14 = arith.constant dense<0.000000e+00> : vector<8x128xf32>
    %12 = tpu.matmul %9, %10, %cst_14 {dimension_numbers = #tpu.dot_dimension_numbers<[1], [0], [0], [1], [0, 0, 1, 1], [], []>} : vector<8x128xf32>, vector<128x128xf32>, vector<8x128xf32> -> vector<8x128xf32>
    %13 = vector.broadcast %11 : vector<1x128xf32> to vector<8x128xf32>
    %14 = arith.addf %12, %13 : vector<8x128xf32>
    %cst_15 = arith.constant 0.000000e+00 : f32
    %15 = vector.broadcast %cst_15 : f32 to vector<8x128xf32>
    %16 = arith.maximumf %14, %15 : vector<8x128xf32>
    %c0_16 = arith.constant 0 : index
    %c0_17 = arith.constant 0 : index
    %17 = vector.load %arg10[%c0_16, %c0_17] : memref<8x128xf32, #tpu.memory_space<vmem>>, vector<8x128xf32>
    tpu.vector_store %arg10[%c0_16, %c0_17], %16 {strides = array<i32>} : memref<8x128xf32, #tpu.memory_space<vmem>>, vector<8x128xf32>,
    %c0_18 = arith.constant 0 : index
    %c0_19 = arith.constant 0 : index
    %18 = vector.load %arg10[%c0_18, %c0_19] : memref<8x128xf32, #tpu.memory_space<vmem>>, vector<8x128xf32>
    %c0_20 = arith.constant 0 : index
    %c0_21 = arith.constant 0 : index
    %19 = vector.load %arg6[%c0_20, %c0_21] : memref<128x128xf32, #tpu.memory_space<vmem>>, vector<128x128xf32>
    %c0_22 = arith.constant 0 : index
    %c0_23 = arith.constant 0 : index
    %20 = vector.load %arg7[%c0_22, %c0_23] : memref<1x128xf32, #tpu.memory_space<vmem>>, vector<1x128xf32>
    %cst_24 = arith.constant dense<0.000000e+00> : vector<8x128xf32>
    %21 = tpu.matmul %18, %19, %cst_24 {dimension_numbers = #tpu.dot_dimension_numbers<[1], [0], [0], [1], [0, 0, 1, 1], [], []>} : vector<8x128xf32>, vector<128x128xf32>, vector<8x128xf32> -> vector<8x128xf32>
    %22 = vector.broadcast %20 : vector<1x128xf32> to vector<8x128xf32>
    %23 = arith.addf %21, %22 : vector<8x128xf32>
    %c0_25 = arith.constant 0 : index
    %c0_26 = arith.constant 0 : index
    %24 = vector.load %arg8[%c0_25, %c0_26] : memref<8x128xf32, #tpu.memory_space<vmem>>, vector<8x128xf32>
    tpu.vector_store %arg8[%c0_25, %c0_26], %23 {strides = array<i32>} : memref<8x128xf32, #tpu.memory_space<vmem>>, vector<8x128xf32>,
    return
  }
  func.func @transform_0(%arg0: i32) -> (i32, i32) {
    %c0_i32 = arith.constant 0 : i32
    %c0_i32_0 = arith.constant 0 : i32
    return %arg0, %c0_i32 : i32, i32
  }
  func.func @transform_1(%arg0: i32) -> (i32, i32) {
    %c0_i32 = arith.constant 0 : i32
    %c0_i32_0 = arith.constant 0 : i32
    %c0_i32_1 = arith.constant 0 : i32
    return %c0_i32, %c0_i32_0 : i32, i32
  }
  func.func @transform_2(%arg0: i32) -> (i32, i32) {
    %c0_i32 = arith.constant 0 : i32
    %c0_i32_0 = arith.constant 0 : i32
    %c0_i32_1 = arith.constant 0 : i32
    return %c0_i32, %c0_i32_0 : i32, i32
  }
  func.func @transform_3(%arg0: i32) -> (i32, i32) {
    %c0_i32 = arith.constant 0 : i32
    %c0_i32_0 = arith.constant 0 : i32
    %c0_i32_1 = arith.constant 0 : i32
    return %c0_i32, %c0_i32_0 : i32, i32
  }
  func.func @transform_4(%arg0: i32) -> (i32, i32) {
    %c0_i32 = arith.constant 0 : i32
    %c0_i32_0 = arith.constant 0 : i32
    %c0_i32_1 = arith.constant 0 : i32
    return %c0_i32, %c0_i32_0 : i32, i32
  }
  func.func @transform_5(%arg0: i32) -> (i32, i32) {
    %c0_i32 = arith.constant 0 : i32
    %c0_i32_0 = arith.constant 0 : i32
    %c0_i32_1 = arith.constant 0 : i32
    return %c0_i32, %c0_i32_0 : i32, i32
  }
  func.func @transform_6(%arg0: i32) -> (i32, i32) {
    %c0_i32 = arith.constant 0 : i32
    %c0_i32_0 = arith.constant 0 : i32
    %c0_i32_1 = arith.constant 0 : i32
    return %c0_i32, %c0_i32_0 : i32, i32
  }
  func.func @transform_7(%arg0: i32) -> (i32, i32) {
    %c0_i32 = arith.constant 0 : i32
    %c0_i32_0 = arith.constant 0 : i32
    return %arg0, %c0_i32 : i32, i32
  }
}

</mosaic_0001>

<llo_original>
// kernel: _mlp_forward.1
$region0: #{_mlp_forward.1}
  #allocation0 [shape = 'u32[]', space=smem, size = 0x4, offset = 0x4, fixed_abs, tag = 'smem constant byte address 0x4 - core index']
  #allocation1 [shape = 'u32[144,128]{1,0:T(1,128)}', space=vmem, size = 0x12000, scoped, tag = 'internal scratch']
  #allocation2 [shape = 'f32[8,128]{1,0:T(8,128)}', space=vmem, size = 0x1000, scoped, tag = 'scratch operand']
  #allocation3 [shape = 'f32[8,128]{1,0:T(8,128)}', space=vmem, size = 0x1000, scoped, tag = 'scratch operand']
  %s0 = inlined_call_operand.vmem [shape: f32[8,128], index: 0, kind: input, shape index: {}]
  %s1 = inlined_call_operand.vmem [shape: f32[128,128], index: 1, kind: input, shape index: {}]
  %s2 = inlined_call_operand.vmem [shape: f32[1,128], index: 2, kind: input, shape index: {}]
  %s3 = inlined_call_operand.vmem [shape: f32[128,128], index: 3, kind: input, shape index: {}]
  %s4 = inlined_call_operand.vmem [shape: f32[1,128], index: 4, kind: input, shape index: {}]
  %s5 = inlined_call_operand.vmem [shape: f32[128,128], index: 5, kind: input, shape index: {}]
  %s6 = inlined_call_operand.vmem [shape: f32[1,128], index: 6, kind: input, shape index: {}]
  %s7 = inlined_call_operand.hbm [shape: f32[8,128], index: 7, kind: output, shape index: {}]
  %s8 = sld [smem:[#allocation0]]
  $region38: #{_mlp_forward.1} parent=0
    _
  %s10 = ssub.s32 1, %s8
  %s11 = scalar_select 0, %s10, %s8
  $region1: #{_mlp_forward.1} parent=0
    #allocation4 [shape = 'u8[4096]{0}', space=vmem, size = 0x1000, scoped, tag = 'output window, operand 0, single buffered']
    #allocation5 [shape = 's32[1]{0}', space=sflag, size = 0x4, scoped, tag = 'scoped memory for _mlp_forward.1']
    %12 = vsyncpa [#allocation5], 0
    // Predicated region
    $region2: #{_mlp_forward.1} parent=1 // pred_check
      _
    $region3: #{_mlp_forward.1} parent=1 // pred_check_branch
      %14 = sbr.rel (0) target = $region5
    $region4: #{_mlp_forward.1} parent=1 // pred_region
      _
    $region5: #{_mlp_forward.1} parent=1 // pred_fallthru
      _
    // Predicated region
    $region6: #{_mlp_forward.1} parent=1 // pred_check
      _
    $region7: #{_mlp_forward.1} parent=1 // pred_check_branch
      %16 = sbr.rel (0) target = $region9
    $region8: #{_mlp_forward.1} parent=1 // pred_region
      _
    $region9: #{_mlp_forward.1} parent=1 // pred_fallthru
      _
    // Predicated region
    $region10: #{_mlp_forward.1} parent=1 // pred_check
      _
    $region11: #{_mlp_forward.1} parent=1 // pred_check_branch
      %18 = sbr.rel (0) target = $region13
    $region12: #{_mlp_forward.1} parent=1 // pred_region
      _
    $region13: #{_mlp_forward.1} parent=1 // pred_fallthru
      _
    // Predicated region
    $region14: #{_mlp_forward.1} parent=1 // pred_check
      _
    $region15: #{_mlp_forward.1} parent=1 // pred_check_branch
      %20 = sbr.rel (0) target = $region17
    $region16: #{_mlp_forward.1} parent=1 // pred_region
      _
    $region17: #{_mlp_forward.1} parent=1 // pred_fallthru
      _
    // Predicated region
    $region18: #{_mlp_forward.1} parent=1 // pred_check
      _
    $region19: #{_mlp_forward.1} parent=1 // pred_check_branch
      %22 = sbr.rel (0) target = $region21
    $region20: #{_mlp_forward.1} parent=1 // pred_region
      _
    $region21: #{_mlp_forward.1} parent=1 // pred_fallthru
      _
    // Predicated region
    $region22: #{_mlp_forward.1} parent=1 // pred_check
      _
    $region23: #{_mlp_forward.1} parent=1 // pred_check_branch
      %24 = sbr.rel (0) target = $region25
    $region24: #{_mlp_forward.1} parent=1 // pred_region
      _
    $region25: #{_mlp_forward.1} parent=1 // pred_fallthru
      _
    // Predicated region
    $region26: #{_mlp_forward.1} parent=1 // pred_check
      _
    $region27: #{_mlp_forward.1} parent=1 // pred_check_branch
      %26 = sbr.rel (0) target = $region29
    $region28: #{_mlp_forward.1} parent=1 // pred_region
      _
    $region29: #{_mlp_forward.1} parent=1 // pred_fallthru
      _
    %v27 = vld [vmem:[%s0] sm:$0xff]
    %v28 = vld [vmem:[%s1] sm:$0xff]
    %v29 = vld [vmem:[%s1 + $0x8] sm:$0xff]
    %v30 = vld [vmem:[%s1 + $0x10] sm:$0xff]
    %v31 = vld [vmem:[%s1 + $0x18] sm:$0xff]
    %v32 = vld [vmem:[%s1 + $0x20] sm:$0xff]
    %v33 = vld [vmem:[%s1 + $0x28] sm:$0xff]
    %v34 = vld [vmem:[%s1 + $0x30] sm:$0xff]
    %v35 = vld [vmem:[%s1 + $0x38] sm:$0xff]
    %v36 = vld [vmem:[%s1 + $0x40] sm:$0xff]
    %v37 = vld [vmem:[%s1 + $0x48] sm:$0xff]
    %v38 = vld [vmem:[%s1 + $0x50] sm:$0xff]
    %v39 = vld [vmem:[%s1 + $0x58] sm:$0xff]
    %v40 = vld [vmem:[%s1 + $0x60] sm:$0xff]
    %v41 = vld [vmem:[%s1 + $0x68] sm:$0xff]
    %v42 = vld [vmem:[%s1 + $0x70] sm:$0xff]
    %v43 = vld [vmem:[%s1 + $0x78] sm:$0xff]
    %v44 = vld [vmem:[%s2] sm:$0x1]
    %v46 = vlaneseq
    %v47 = vshrl.u32 %v46, 7
    %v48 = vsub.s32 0, %v47
    %v49 = vrot.slane %v44, %v48
    %51 = vmatprep.subr.mxu0 0.0
    %52 = vmatpush1.msra.mxu0 %v28
    %53 = vmatprep.subr.mxu0 0.0
    %54 = vmatpush1.msra.mxu0 %v29
    %55 = vmatprep.subr.mxu0 0.0
    %56 = vmatpush1.msra.mxu0 %v30
    %57 = vmatprep.subr.mxu0 0.0
    %58 = vmatpush1.msra.mxu0 %v31
    %59 = vmatprep.subr.mxu0 0.0
    %60 = vmatpush1.msra.mxu0 %v32
    %61 = vmatprep.subr.mxu0 0.0
    %62 = vmatpush1.msra.mxu0 %v33
    %63 = vmatprep.subr.mxu0 0.0
    %64 = vmatpush1.msra.mxu0 %v34
    %65 = vmatprep.subr.mxu0 0.0
    %66 = vmatpush1.msra.mxu0 %v35
    %67 = vmatprep.subr.mxu0 0.0
    %68 = vmatpush1.msra.mxu0 %v36
    %69 = vmatprep.subr.mxu0 0.0
    %70 = vmatpush1.msra.mxu0 %v37
    %71 = vmatprep.subr.mxu0 0.0
    %72 = vmatpush1.msra.mxu0 %v38
    %73 = vmatprep.subr.mxu0 0.0
    %74 = vmatpush1.msra.mxu0 %v39
    %75 = vmatprep.subr.mxu0 0.0
    %76 = vmatpush1.msra.mxu0 %v40
    %77 = vmatprep.subr.mxu0 0.0
    %78 = vmatpush1.msra.mxu0 %v41
    %79 = vmatprep.subr.mxu0 0.0
    %80 = vmatpush1.msra.mxu0 %v42
    %81 = vmatprep.subr.mxu0 0.0
    %82 = vmatpush1.msra.mxu0 %v43
    %83 = vmatprep.subr.mxu0 0.0
    %84 = vmatpush1.msra.mxu0 0.0
    %85 = vmatprep.subr.mxu0 0.0
    %86 = vmatpush1.msra.mxu0 0.0
    %87 = vmatprep.subr.mxu0 0.0
    %88 = vmatpush1.msra.mxu0 0.0
    %89 = vmatprep.subr.mxu0 0.0
    %90 = vmatpush1.msra.mxu0 0.0
    %91 = vmatprep.subr.mxu0 0.0
    %92 = vmatpush1.msra.mxu0 0.0
    %93 = vmatprep.subr.mxu0 0.0
    %94 = vmatpush1.msra.mxu0 0.0
    %95 = vmatprep.subr.mxu0 0.0
    %96 = vmatpush1.msra.mxu0 0.0
    %97 = vmatprep.subr.mxu0 0.0
    %98 = vmatpush1.msra.mxu0 0.0
    %99 = vmatprep.subr.mxu0 0.0
    %100 = vmatpush1.msra.mxu0 0.0
    %101 = vmatprep.subr.mxu0 0.0
    %102 = vmatpush1.msra.mxu0 0.0
    %103 = vmatprep.subr.mxu0 0.0
    %104 = vmatpush1.msra.mxu0 0.0
    %105 = vmatprep.subr.mxu0 0.0
    %106 = vmatpush1.msra.mxu0 0.0
    %107 = vmatprep.subr.mxu0 0.0
    %108 = vmatpush1.msra.mxu0 0.0
    %109 = vmatprep.subr.mxu0 0.0
    %110 = vmatpush1.msra.mxu0 0.0
    %111 = vmatprep.subr.mxu0 0.0
    %112 = vmatpush1.msra.mxu0 0.0
    %113 = vmatprep.subr.mxu0 0.0
    %114 = vmatpush1.msra.mxu0 0.0
    %115 = vmatprep.mubr.f32.mxu0 0.0
    %116 = vmatmul.mubr.f32.gmra.mrb[0].mxu0 %v27
    %v117 = vpop.f32.mrb[0].mxu0
    %v118 = vadd.f32 %v49, %v117
    %v119 = vpop.f32.mrb[0].mxu0
    %120 = vdwg.mxu0
    %v121 = vmax.f32 %v118, 0.0
    %122 = vst [vmem:[#allocation2] sm:$0xff] %v121
    %v123 = vld [vmem:[#allocation2] sm:$0xff]
    %v124 = vld [vmem:[%s3] sm:$0xff]
    %v125 = vld [vmem:[%s3 + $0x8] sm:$0xff]
    %v126 = vld [vmem:[%s3 + $0x10] sm:$0xff]
    %v127 = vld [vmem:[%s3 + $0x18] sm:$0xff]
    %v128 = vld [vmem:[%s3 + $0x20] sm:$0xff]
    %v129 = vld [vmem:[%s3 + $0x28] sm:$0xff]
    %v130 = vld [vmem:[%s3 + $0x30] sm:$0xff]
    %v131 = vld [vmem:[%s3 + $0x38] sm:$0xff]
    %v132 = vld [vmem:[%s3 + $0x40] sm:$0xff]
    %v133 = vld [vmem:[%s3 + $0x48] sm:$0xff]
    %v134 = vld [vmem:[%s3 + $0x50] sm:$0xff]
    %v135 = vld [vmem:[%s3 + $0x58] sm:$0xff]
    %v136 = vld [vmem:[%s3 + $0x60] sm:$0xff]
    %v137 = vld [vmem:[%s3 + $0x68] sm:$0xff]
    %v138 = vld [vmem:[%s3 + $0x70] sm:$0xff]
    %v139 = vld [vmem:[%s3 + $0x78] sm:$0xff]
    %v140 = vld [vmem:[%s4] sm:$0x1]
    %v142 = vlaneseq
    %v143 = vshrl.u32 %v142, 7
    %v144 = vsub.s32 0, %v143
    %v145 = vrot.slane %v140, %v144
    %147 = vmatprep.subr.mxu0 0.0
    %148 = vmatpush1.msra.mxu0 %v124
    %149 = vmatprep.subr.mxu0 0.0
    %150 = vmatpush1.msra.mxu0 %v125
    %151 = vmatprep.subr.mxu0 0.0
    %152 = vmatpush1.msra.mxu0 %v126
    %153 = vmatprep.subr.mxu0 0.0
    %154 = vmatpush1.msra.mxu0 %v127
    %155 = vmatprep.subr.mxu0 0.0
    %156 = vmatpush1.msra.mxu0 %v128
    %157 = vmatprep.subr.mxu0 0.0
    %158 = vmatpush1.msra.mxu0 %v129
    %159 = vmatprep.subr.mxu0 0.0
    %160 = vmatpush1.msra.mxu0 %v130
    %161 = vmatprep.subr.mxu0 0.0
    %162 = vmatpush1.msra.mxu0 %v131
    %163 = vmatprep.subr.mxu0 0.0
    %164 = vmatpush1.msra.mxu0 %v132
    %165 = vmatprep.subr.mxu0 0.0
    %166 = vmatpush1.msra.mxu0 %v133
    %167 = vmatprep.subr.mxu0 0.0
    %168 = vmatpush1.msra.mxu0 %v134
    %169 = vmatprep.subr.mxu0 0.0
    %170 = vmatpush1.msra.mxu0 %v135
    %171 = vmatprep.subr.mxu0 0.0
    %172 = vmatpush1.msra.mxu0 %v136
    %173 = vmatprep.subr.mxu0 0.0
    %174 = vmatpush1.msra.mxu0 %v137
    %175 = vmatprep.subr.mxu0 0.0
    %176 = vmatpush1.msra.mxu0 %v138
    %177 = vmatprep.subr.mxu0 0.0
    %178 = vmatpush1.msra.mxu0 %v139
    %179 = vmatprep.subr.mxu0 0.0
    %180 = vmatpush1.msra.mxu0 0.0
    %181 = vmatprep.subr.mxu0 0.0
    %182 = vmatpush1.msra.mxu0 0.0
    %183 = vmatprep.subr.mxu0 0.0
    %184 = vmatpush1.msra.mxu0 0.0
    %185 = vmatprep.subr.mxu0 0.0
    %186 = vmatpush1.msra.mxu0 0.0
    %187 = vmatprep.subr.mxu0 0.0
    %188 = vmatpush1.msra.mxu0 0.0
    %189 = vmatprep.subr.mxu0 0.0
    %190 = vmatpush1.msra.mxu0 0.0
    %191 = vmatprep.subr.mxu0 0.0
    %192 = vmatpush1.msra.mxu0 0.0
    %193 = vmatprep.subr.mxu0 0.0
    %194 = vmatpush1.msra.mxu0 0.0
    %195 = vmatprep.subr.mxu0 0.0
    %196 = vmatpush1.msra.mxu0 0.0
    %197 = vmatprep.subr.mxu0 0.0
    %198 = vmatpush1.msra.mxu0 0.0
    %199 = vmatprep.subr.mxu0 0.0
    %200 = vmatpush1.msra.mxu0 0.0
    %201 = vmatprep.subr.mxu0 0.0
    %202 = vmatpush1.msra.mxu0 0.0
    %203 = vmatprep.subr.mxu0 0.0
    %204 = vmatpush1.msra.mxu0 0.0
    %205 = vmatprep.subr.mxu0 0.0
    %206 = vmatpush1.msra.mxu0 0.0
    %207 = vmatprep.subr.mxu0 0.0
    %208 = vmatpush1.msra.mxu0 0.0
    %209 = vmatprep.subr.mxu0 0.0
    %210 = vmatpush1.msra.mxu0 0.0
    %211 = vmatprep.mubr.f32.mxu0 0.0
    %212 = vmatmul.mubr.f32.gmra.mrb[0].mxu0 %v123
    %v213 = vpop.f32.mrb[0].mxu0
    %v214 = vadd.f32 %v145, %v213
    %v215 = vpop.f32.mrb[0].mxu0
    %216 = vdwg.mxu0
    %v217 = vmax.f32 %v214, 0.0
    %218 = vst [vmem:[#allocation3] sm:$0xff] %v217
    %v219 = vld [vmem:[#allocation3] sm:$0xff]
    %v220 = vld [vmem:[%s5] sm:$0xff]
    %v221 = vld [vmem:[%s5 + $0x8] sm:$0xff]
    %v222 = vld [vmem:[%s5 + $0x10] sm:$0xff]
    %v223 = vld [vmem:[%s5 + $0x18] sm:$0xff]
    %v224 = vld [vmem:[%s5 + $0x20] sm:$0xff]
    %v225 = vld [vmem:[%s5 + $0x28] sm:$0xff]
    %v226 = vld [vmem:[%s5 + $0x30] sm:$0xff]
    %v227 = vld [vmem:[%s5 + $0x38] sm:$0xff]
    %v228 = vld [vmem:[%s5 + $0x40] sm:$0xff]
    %v229 = vld [vmem:[%s5 + $0x48] sm:$0xff]
    %v230 = vld [vmem:[%s5 + $0x50] sm:$0xff]
    %v231 = vld [vmem:[%s5 + $0x58] sm:$0xff]
    %v232 = vld [vmem:[%s5 + $0x60] sm:$0xff]
    %v233 = vld [vmem:[%s5 + $0x68] sm:$0xff]
    %v234 = vld [vmem:[%s5 + $0x70] sm:$0xff]
    %v235 = vld [vmem:[%s5 + $0x78] sm:$0xff]
    %v236 = vld [vmem:[%s6] sm:$0x1]
    %v238 = vlaneseq
    %v239 = vshrl.u32 %v238, 7
    %v240 = vsub.s32 0, %v239
    %v241 = vrot.slane %v236, %v240
    %243 = vmatprep.subr.mxu0 0.0
    %244 = vmatpush1.msra.mxu0 %v220
    %245 = vmatprep.subr.mxu0 0.0
    %246 = vmatpush1.msra.mxu0 %v221
    %247 = vmatprep.subr.mxu0 0.0
    %248 = vmatpush1.msra.mxu0 %v222
    %249 = vmatprep.subr.mxu0 0.0
    %250 = vmatpush1.msra.mxu0 %v223
    %251 = vmatprep.subr.mxu0 0.0
    %252 = vmatpush1.msra.mxu0 %v224
    %253 = vmatprep.subr.mxu0 0.0
    %254 = vmatpush1.msra.mxu0 %v225
    %255 = vmatprep.subr.mxu0 0.0
    %256 = vmatpush1.msra.mxu0 %v226
    %257 = vmatprep.subr.mxu0 0.0
    %258 = vmatpush1.msra.mxu0 %v227
    %259 = vmatprep.subr.mxu0 0.0
    %260 = vmatpush1.msra.mxu0 %v228
    %261 = vmatprep.subr.mxu0 0.0
    %262 = vmatpush1.msra.mxu0 %v229
    %263 = vmatprep.subr.mxu0 0.0
    %264 = vmatpush1.msra.mxu0 %v230
    %265 = vmatprep.subr.mxu0 0.0
    %266 = vmatpush1.msra.mxu0 %v231
    %267 = vmatprep.subr.mxu0 0.0
    %268 = vmatpush1.msra.mxu0 %v232
    %269 = vmatprep.subr.mxu0 0.0
    %270 = vmatpush1.msra.mxu0 %v233
    %271 = vmatprep.subr.mxu0 0.0
    %272 = vmatpush1.msra.mxu0 %v234
    %273 = vmatprep.subr.mxu0 0.0
    %274 = vmatpush1.msra.mxu0 %v235
    %275 = vmatprep.subr.mxu0 0.0
    %276 = vmatpush1.msra.mxu0 0.0
    %277 = vmatprep.subr.mxu0 0.0
    %278 = vmatpush1.msra.mxu0 0.0
    %279 = vmatprep.subr.mxu0 0.0
    %280 = vmatpush1.msra.mxu0 0.0
    %281 = vmatprep.subr.mxu0 0.0
    %282 = vmatpush1.msra.mxu0 0.0
    %283 = vmatprep.subr.mxu0 0.0
    %284 = vmatpush1.msra.mxu0 0.0
    %285 = vmatprep.subr.mxu0 0.0
    %286 = vmatpush1.msra.mxu0 0.0
    %287 = vmatprep.subr.mxu0 0.0
    %288 = vmatpush1.msra.mxu0 0.0
    %289 = vmatprep.subr.mxu0 0.0
    %290 = vmatpush1.msra.mxu0 0.0
    %291 = vmatprep.subr.mxu0 0.0
    %292 = vmatpush1.msra.mxu0 0.0
    %293 = vmatprep.subr.mxu0 0.0
    %294 = vmatpush1.msra.mxu0 0.0
    %295 = vmatprep.subr.mxu0 0.0
    %296 = vmatpush1.msra.mxu0 0.0
    %297 = vmatprep.subr.mxu0 0.0
    %298 = vmatpush1.msra.mxu0 0.0
    %299 = vmatprep.subr.mxu0 0.0
    %300 = vmatpush1.msra.mxu0 0.0
    %301 = vmatprep.subr.mxu0 0.0
    %302 = vmatpush1.msra.mxu0 0.0
    %303 = vmatprep.subr.mxu0 0.0
    %304 = vmatpush1.msra.mxu0 0.0
    %305 = vmatprep.subr.mxu0 0.0
    %306 = vmatpush1.msra.mxu0 0.0
    %307 = vmatprep.mubr.f32.mxu0 0.0
    %308 = vmatmul.mubr.f32.gmra.mrb[0].mxu0 %v219
    %v309 = vpop.f32.mrb[0].mxu0
    %v310 = vadd.f32 %v241, %v309
    %v311 = vpop.f32.mrb[0].mxu0
    %312 = vdwg.mxu0
    %313 = vst [vmem:[#allocation4] sm:$0xff] %v310
    // Predicated region
    $region30: #{_mlp_forward.1} parent=1 // pred_check
      _
    $region31: #{_mlp_forward.1} parent=1 // pred_check_branch
      %315 = sbr.rel (0) target = $region33
    $region32: #{_mlp_forward.1} parent=1 // pred_region
      %s317 = ssub.s32 128, 128
      %318 = vsyncadd [#allocation5], %s317
      %s320 = sshll.u32 [#allocation4], 4
      %s321 = int_to_ptr.vmem [resolvable:$true] %s320
      %323 = dma.vmem_to_hbm [thread:$0]  %s321, 128, %s7, [#allocation5]
    $region33: #{_mlp_forward.1} parent=1 // pred_fallthru
      _
    // Predicated region
    $region34: #{_mlp_forward.1} parent=1 // pred_check
      _
    $region35: #{_mlp_forward.1} parent=1 // pred_check_branch
      %325 = sbr.rel (0) target = $region37
    $region36: #{_mlp_forward.1} parent=1 // pred_region
      %326 = dma.done [#allocation5], 128
    $region37: #{_mlp_forward.1} parent=1 // pred_fallthru
      _
    %327 = vsyncpa [#allocation5], 1

</llo_original>
